<compile_context>
chip_gen: v7x
topology: tpu7x:2x2x1
jax: 0.10.0
libtpu: 0.0.40
codegen_flags: <defaults>
</compile_context>

<pallas_src>
import jax
import jax.numpy as jnp
from jax import lax
from jax.experimental import pallas as pl
from jax.experimental.pallas import tpu as pltpu


def _round_up(x, m):
    return ((x + m - 1) // m) * m


# --------------------------- roll convention probe ---------------------------
def _detect_roll_convention():
    """True iff pltpu.roll follows numpy.roll semantics (result[i] == x[i-shift])."""
    def kern(x_ref, o_ref):
        o_ref[...] = pltpu.roll(x_ref[...], 1, 1)

    x = jnp.tile(jnp.arange(128, dtype=jnp.float32)[None, :], (8, 1))
    out = pl.pallas_call(
        kern, out_shape=jax.ShapeDtypeStruct((8, 128), jnp.float32))(x)
    first = float(jax.block_until_ready(out)[0, 0])
    if first == 127.0:
        return True
    if first == 1.0:
        return False
    raise RuntimeError(f"unexpected pltpu.roll semantics (probe={first})")


# ------------------------------- fused kernel --------------------------------
def _make_kernel(H, W, NP1, NP2, NP3, roll_np):
    """TinyVGG_2 forward for one image.

    Activations are (channels, flat_spatial) f32, flat spatial zero-padded to
    NP1 (28x28 grid), NP2 (14x14 grid) and NP3 (7x7 grid) lanes.
    """
    H2, W2 = H // 2, W // 2

    def shift_for(off, n):
        # lane shift such that result[p] == x[(p + off) % n]
        return (-off) % n if roll_np else off % n

    def kernel(x_ref,
               w1a_ref, b1a_ref, w1b_ref, b1b_ref,
               w2a_ref, b2a_ref, w2b_ref, b2b_ref,
               s1_ref, s2_ref, wfc_ref, bfc_ref, o_ref):

        def edge_masks(h, w, n):
            idx = lax.broadcasted_iota(jnp.int32, (1, n), 1)
            col = idx % w
            row = idx // w
            colm = {-1: (col >= 1).astype(jnp.float32), 0: None,
                    1: (col <= w - 2).astype(jnp.float32)}
            rowm = {-1: (row >= 1).astype(jnp.float32), 0: None,
                    1: (row <= h - 2).astype(jnp.float32)}
            masks = {}
            for dy in (-1, 0, 1):
                for dx in (-1, 0, 1):
                    m = rowm[dy]
                    if colm[dx] is not None:
                        m = colm[dx] if m is None else m * colm[dx]
                    masks[(dy, dx)] = m
            return masks

        def conv3x3_relu(a, w_ref, b_ref, w, n, masks):
            # one fused MXU dot: (Cout, 9*Cin) @ (9*Cin, n)
            taps = []
            for dy in (-1, 0, 1):
                for dx in (-1, 0, 1):
                    off = dy * w + dx
                    t = a if off == 0 else pltpu.roll(a, shift_for(off, n), 1)
                    m = masks[(dy, dx)]
                    if m is not None:
                        t = t * m
                    taps.append(t)
            stacked = jnp.concatenate(taps, axis=0)
            y = jnp.dot(w_ref[...], stacked,
                        preferred_element_type=jnp.float32)
            return jnp.maximum(y + b_ref[...], 0.0)

        def maxpool2x2_compact(a, w, n, s_ref):
            # 2x2 / stride-2 max pool, then compact the stride-2 grid to a
            # dense lane-padded buffer with one 0/1-selection MXU dot.
            p1 = pltpu.roll(a, shift_for(1, n), 1)
            p2 = pltpu.roll(a, shift_for(w, n), 1)
            p3 = pltpu.roll(a, shift_for(w + 1, n), 1)
            pooled = jnp.maximum(jnp.maximum(a, p1), jnp.maximum(p2, p3))
            return jnp.dot(pooled, s_ref[...],
                           preferred_element_type=jnp.float32)

        m1 = edge_masks(H, W, NP1)      # hoisted: shared by both block-1 convs
        m2 = edge_masks(H2, W2, NP2)    # hoisted: shared by both block-2 convs

        a = conv3x3_relu(x_ref[...], w1a_ref, b1a_ref, W, NP1, m1)
        a = conv3x3_relu(a, w1b_ref, b1b_ref, W, NP1, m1)
        a = maxpool2x2_compact(a, W, NP1, s1_ref)        # (C, NP2), 14x14
        a = conv3x3_relu(a, w2a_ref, b2a_ref, W2, NP2, m2)
        a = conv3x3_relu(a, w2b_ref, b2b_ref, W2, NP2, m2)
        a = maxpool2x2_compact(a, W2, NP2, s2_ref)       # (C, NP3), 7x7

        # classifier: NCHW-order flatten (channel-major) + one dot
        C = a.shape[0]
        flat = jnp.concatenate([a[c:c + 1, :] for c in range(C)], axis=1)
        out = jnp.dot(flat, wfc_ref[...], preferred_element_type=jnp.float32)
        o_ref[...] = (out + bfc_ref[...]).astype(o_ref.dtype)

    return kernel


def make_forward(roll_np: bool):
    @jax.jit
    def forward(x_nchw, packed):
        B, Cin, H, W = x_nchw.shape
        N1 = H * W
        O = packed["bfc"].shape[-1]
        NP1, NP2 = packed["s1"].shape
        NP3 = packed["s2"].shape[1]
        CinP = packed["w1a"].shape[1] // 9

        # one small host-side repack per forward: pad channels to 8 sublanes
        # and the flat spatial axis to NP1 lanes (everything else is done
        # once in pack_params).
        x3 = jnp.zeros((B, CinP, NP1), jnp.float32)
        x3 = x3.at[:, :Cin, :N1].set(
            x_nchw.reshape(B, Cin, N1).astype(jnp.float32))

        def const_spec(a):
            return pl.BlockSpec(a.shape, lambda b: (0,) * a.ndim)

        args = (x3,
                packed["w1a"], packed["b1a"], packed["w1b"], packed["b1b"],
                packed["w2a"], packed["b2a"], packed["w2b"], packed["b2b"],
                packed["s1"], packed["s2"], packed["wfc"], packed["bfc"])
        in_specs = [pl.BlockSpec((None, CinP, NP1), lambda b: (b, 0, 0))]
        in_specs += [const_spec(a) for a in args[1:]]

        out = pl.pallas_call(
            _make_kernel(H, W, NP1, NP2, NP3, roll_np),
            out_shape=jax.ShapeDtypeStruct((B, 1, O), jnp.float32),
            grid=(B,),
            in_specs=in_specs,
            out_specs=pl.BlockSpec((None, 1, O), lambda b: (b, 0, 0)),
            compiler_params=pltpu.CompilerParams(
                dimension_semantics=("parallel",)),
        )(*args)
        return out.reshape(B, O)

    return forward


# --------------------------- one-time weight repack ---------------------------
def pack_params(params):
    """Repack PyTorch-layout params into kernel-ready layouts (done once)."""
    C, Cin = params["c1a_w"].shape[0], params["c1a_w"].shape[1]
    O, F = params["fc_w"].shape
    Ho = Wo = int(round((F // C) ** 0.5))            # 7
    H, W = 4 * Ho, 4 * Wo                            # 28
    H2, W2 = H // 2, W // 2
    NP1 = _round_up(H * W, 128)                      # 896
    NP2 = _round_up(H2 * W2, 128)                    # 256
    NP3 = _round_up(Ho * Wo, 64)                     # 64

    def conv_pack(w):
        # (Cout, Cin, 3, 3) -> (Cout, 9*CinP), K index = tap*CinP + cin
        cout, cin = w.shape[0], w.shape[1]
        cin_p = _round_up(cin, 8)
        wp = jnp.zeros((cout, 3, 3, cin_p), jnp.float32)
        wp = wp.at[:, :, :, :cin].set(
            jnp.transpose(w.astype(jnp.float32), (0, 2, 3, 1)))
        return wp.reshape(cout, 9 * cin_p)

    def select_matrix(hs, ws, src_pad, dst_pad):
        # 0/1 gather: picks the (even row, even col) positions of an hs x ws
        # grid (= 2x2 max-pool output positions) into a dense ho x wo grid.
        ho, wo = hs // 2, ws // 2
        r = jnp.arange(ho)
        q = jnp.arange(wo)
        src = ((2 * r)[:, None] * ws + 2 * q[None, :]).reshape(-1)
        dst = (r[:, None] * wo + q[None, :]).reshape(-1)
        return jnp.zeros((src_pad, dst_pad), jnp.float32).at[src, dst].set(1.0)

    # classifier weight: flat feature (c, p) lives at lane c*NP3 + p
    w4 = params["fc_w"].reshape(O, C, Ho * Wo).astype(jnp.float32)
    wfc = jnp.zeros((C, NP3, O), jnp.float32)
    wfc = wfc.at[:, :Ho * Wo, :].set(jnp.transpose(w4, (1, 2, 0)))
    wfc = wfc.reshape(C * NP3, O)

    def cb(b):
        return b.reshape(C, 1).astype(jnp.float32)

    return {
        "w1a": conv_pack(params["c1a_w"]), "b1a": cb(params["c1a_b"]),
        "w1b": conv_pack(params["c1b_w"]), "b1b": cb(params["c1b_b"]),
        "w2a": conv_pack(params["c2a_w"]), "b2a": cb(params["c2a_b"]),
        "w2b": conv_pack(params["c2b_w"]), "b2b": cb(params["c2b_b"]),
        "s1": select_matrix(H, W, NP1, NP2),
        "s2": select_matrix(H2, W2, NP2, NP3),
        "wfc": wfc,
        "bfc": params["fc_b"].reshape(1, O).astype(jnp.float32),
    }


# ------------------------------ init & reference ------------------------------
def init_params(key, in_ch, hidden, out_ch):
    ks = jax.random.split(key, 10)

    def cw(k, cout, cin):
        return (jax.random.normal(k, (cout, cin, 3, 3), jnp.float32)
                * (1.0 / jnp.sqrt(9.0 * cin)))

    def cb(k, cout):
        return jax.random.normal(k, (cout,), jnp.float32) * 0.01

    fan_in = hidden * 7 * 7
    return {
        "c1a_w": cw(ks[0], hidden, in_ch), "c1a_b": cb(ks[1], hidden),
        "c1b_w": cw(ks[2], hidden, hidden), "c1b_b": cb(ks[3], hidden),
        "c2a_w": cw(ks[4], hidden, hidden), "c2a_b": cb(ks[5], hidden),
        "c2b_w": cw(ks[6], hidden, hidden), "c2b_b": cb(ks[7], hidden),
        "fc_w": (jax.random.normal(ks[8], (out_ch, fan_in), jnp.float32)
                 * (1.0 / jnp.sqrt(float(fan_in)))),
        "fc_b": jax.random.normal(ks[9], (out_ch,), jnp.float32) * 0.01,
    }


def reference_forward(x, params, precision=None):
    """Pure-JAX (XLA) reference matching the PyTorch module."""
    def conv(h, w, b):
        y = lax.conv_general_dilated(
            h, w, window_strides=(1, 1), padding=((1, 1), (1, 1)),
            dimension_numbers=("NCHW", "OIHW", "NCHW"), precision=precision)
        return jax.nn.relu(y + b.reshape(1, -1, 1, 1))

    def pool(h):
        return lax.reduce_window(h, -jnp.inf, lax.max,
                                 (1, 1, 2, 2), (1, 1, 2, 2), "VALID")

    h = conv(x, params["c1a_w"], params["c1a_b"])
    h = conv(h, params["c1b_w"], params["c1b_b"])
    h = pool(h)
    h = conv(h, params["c2a_w"], params["c2a_b"])
    h = conv(h, params["c2b_w"], params["c2b_b"])
    h = pool(h)
    flat = h.reshape(h.shape[0], -1)            # PyTorch NCHW flatten order
    return jnp.dot(flat, params["fc_w"].T, precision=precision) + params["fc_b"]


if __name__ == "__main__":
    # classifier in_features = hidden*7*7 implies 28x28 input (28 -> 14 -> 7)
    B, IN_CH, HIDDEN, OUT = 2, 3, 8, 10
    key = jax.random.PRNGKey(0)
    kx, kp = jax.random.split(key)
    x = jax.random.normal(kx, (B, IN_CH, 28, 28), jnp.float32)
    params = init_params(kp, IN_CH, HIDDEN, OUT)
    packed = pack_params(params)                 # one-time repack

    forward = make_forward(_detect_roll_convention())
    out = jax.block_until_ready(forward(x, packed))
    assert out.shape == (B, OUT), out.shape

    # All in-kernel math is f32, so the kernel should track the exact-f32
    # reference to ~1e-5 (primary, tight check); fall back to the TPU
    # default-precision reference only if the MXU f32 emulation rounds
    # differently.
    ref_hi = reference_forward(x, params, precision=lax.Precision.HIGHEST)
    ref_lo = reference_forward(x, params, precision=None)
    err_hi = float(jnp.max(jnp.abs(out - ref_hi)))
    err_lo = float(jnp.max(jnp.abs(out - ref_lo)))
    assert err_hi < 1e-4 or err_lo < 2e-3, (err_hi, err_lo)
    print("KERNEL_OK")
</pallas_src>

<mosaic_0001>
module attributes {stable_mosaic.version = 11 : i64} {
  func.func @kern(%arg0: memref<8x128xf32, #tpu.memory_space<vmem>>, %arg1: memref<8x128xf32, #tpu.memory_space<vmem>>) attributes {dimension_semantics = [], scalar_prefetch = 0 : i64, scratch_operands = 0 : i64, tpu.core_type = #tpu.core_type<tc>} {
    %c0 = arith.constant 0 : index
    %c0_0 = arith.constant 0 : index
    %0 = vector.load %arg0[%c0, %c0_0] : memref<8x128xf32, #tpu.memory_space<vmem>>, vector<8x128xf32>
    %c1_i32 = arith.constant 1 : i32
    %1 = tpu.dynamic_rotate %0 by %c1_i32 dim 1 : vector<8x128xf32>, i32 -> vector<8x128xf32>
    %c0_1 = arith.constant 0 : index
    %c0_2 = arith.constant 0 : index
    %2 = vector.load %arg1[%c0_1, %c0_2] : memref<8x128xf32, #tpu.memory_space<vmem>>, vector<8x128xf32>
    tpu.vector_store %arg1[%c0_1, %c0_2], %1 {strides = array<i32>} : memref<8x128xf32, #tpu.memory_space<vmem>>, vector<8x128xf32>,
    return
  }
}

</mosaic_0001>

<llo_original>
// kernel: tpu_custom_call.1
$region0: #{tpu_custom_call.1}
  #allocation0 [shape = 'u32[]', space=smem, size = 0x4, offset = 0x4, fixed_abs, tag = 'smem constant byte address 0x4 - core index']
  #allocation1 [shape = 'u32[144,128]{1,0:T(1,128)}', space=vmem, size = 0x12000, scoped, tag = 'internal scratch']
  %s0 = inlined_call_operand.hbm [shape: f32[8,128], index: 0, kind: input, shape index: {}]
  %s1 = inlined_call_operand.hbm [shape: f32[8,128], index: 1, kind: output, shape index: {}]
  %s2 = sld [smem:[#allocation0]]
  $region18: #{tpu_custom_call.1} parent=0
    _
  %s4 = ssub.s32 1, %s2
  %s5 = scalar_select 0, %s4, %s2
  $region1: #{tpu_custom_call.1} parent=0
    #allocation2 [shape = 'u8[4096]{0}', space=vmem, size = 0x1000, scoped, tag = 'input window, operand 0, single buffered']
    #allocation3 [shape = 's32[1]{0}', space=sflag, size = 0x4, scoped, tag = 'scoped memory for tpu_custom_call.1']
    #allocation4 [shape = 's32[1]{0}', space=sflag, size = 0x4, scoped, tag = 'scoped memory for tpu_custom_call.1']
    #allocation5 [shape = 'u8[4096]{0}', space=vmem, size = 0x1000, scoped, tag = 'output window, operand 0, single buffered']
    %6 = vsyncpa [#allocation3], 0
    %7 = vsyncpa [#allocation4], 0
    // Predicated region
    $region2: #{tpu_custom_call.1} parent=1 // pred_check
      _
    $region3: #{tpu_custom_call.1} parent=1 // pred_check_branch
      %9 = sbr.rel (0) target = $region5
    $region4: #{tpu_custom_call.1} parent=1 // pred_region
      %s11 = ssub.s32 128, 128
      %12 = vsyncadd [#allocation3], %s11
      %s14 = sshll.u32 [#allocation2], 4
      %s15 = int_to_ptr.vmem [resolvable:$true] %s14
      %17 = dma.hbm_to_vmem [thread:$0]  %s0, 128, %s15, [#allocation3]
    $region5: #{tpu_custom_call.1} parent=1 // pred_fallthru
      _
    // Predicated region
    $region6: #{tpu_custom_call.1} parent=1 // pred_check
      _
    $region7: #{tpu_custom_call.1} parent=1 // pred_check_branch
      %19 = sbr.rel (0) target = $region9
    $region8: #{tpu_custom_call.1} parent=1 // pred_region
      %20 = dma.done [#allocation3], 128
    $region9: #{tpu_custom_call.1} parent=1 // pred_fallthru
      _
    %v21 = vld [vmem:[#allocation2] sm:$0xff]
    %22 = vrot.lane.b32.xlu0 %v21, 1
    %v23 = vpop.permute.xlu0 %22
    %24 = vst [vmem:[#allocation5] sm:$0xff] %v23
    // Predicated region
    $region10: #{tpu_custom_call.1} parent=1 // pred_check
      _
    $region11: #{tpu_custom_call.1} parent=1 // pred_check_branch
      %26 = sbr.rel (0) target = $region13
    $region12: #{tpu_custom_call.1} parent=1 // pred_region
      %s28 = ssub.s32 128, 128
      %29 = vsyncadd [#allocation4], %s28
      %s31 = sshll.u32 [#allocation5], 4
      %s32 = int_to_ptr.vmem [resolvable:$true] %s31
      %34 = dma.vmem_to_hbm [thread:$0]  %s32, 128, %s1, [#allocation4]
    $region13: #{tpu_custom_call.1} parent=1 // pred_fallthru
      _
    // Predicated region
    $region14: #{tpu_custom_call.1} parent=1 // pred_check
      _
    $region15: #{tpu_custom_call.1} parent=1 // pred_check_branch
      %36 = sbr.rel (0) target = $region17
    $region16: #{tpu_custom_call.1} parent=1 // pred_region
      %37 = dma.done [#allocation4], 128
    $region17: #{tpu_custom_call.1} parent=1 // pred_fallthru
      _
    %38 = vsyncpa [#allocation3], 1
    %39 = vsyncpa [#allocation4], 1

</llo_original>
